<compile_context>
chip_gen: v6e
topology: v6e:2x2x1
jax: 0.10.0
libtpu: 0.0.40
codegen_flags: <defaults>
</compile_context>

<pallas_src>
import functools

import jax
import jax.numpy as jnp
from jax.experimental import pallas as pl
from jax.experimental.pallas import tpu as pltpu

_H1, _H2 = 400, 300


def _round_up(x, m):
    return (x + m - 1) // m * m


def _pad2d(a, rows, cols):
    return jnp.pad(a, ((0, rows - a.shape[0]), (0, cols - a.shape[1])))


def sac_critic_kernel(x_ref, w1_ref, b1_ref, w2_ref, b2_ref, w3_ref, b3_ref,
                      out_ref):
    # x_ref : (Bp, Dp)
    # w1_ref: (1, Dp, H1p)   b1_ref: (1, 1, H1p)
    # w2_ref: (1, H1p, H2p)  b2_ref: (1, 1, H2p)
    # w3_ref: (1, 1, H2p)    b3_ref: (1, 1, 1)
    # out_ref: (1, Bp, 1)
    x = x_ref[...]
    h1 = jnp.tanh(
        jnp.dot(x, w1_ref[0], preferred_element_type=jnp.float32) + b1_ref[0])
    h2 = jnp.tanh(
        jnp.dot(h1, w2_ref[0], preferred_element_type=jnp.float32) + b2_ref[0])
    # Final 300->1 layer: VPU multiply + cross-lane reduction (no MXU waste).
    q = jnp.sum(h2 * w3_ref[0], axis=-1, keepdims=True) + b3_ref[0]  # (Bp, 1)
    out_ref[0] = q


def pack_sac_critic_params(params):
    """Pad + stack per-critic parameters ONCE (not per forward call)."""
    D = params[0]["w1"].shape[0]
    Dp = _round_up(D, 8)          # sublane dim of w1 / full-extent lane dim of x
    H1p = _round_up(_H1, 128)
    H2p = _round_up(_H2, 128)
    packed = {
        "w1": jnp.stack([_pad2d(p["w1"], Dp, H1p) for p in params]),        # (C, Dp, H1p)
        "b1": jnp.stack([_pad2d(p["b1"][None, :], 1, H1p) for p in params]),  # (C, 1, H1p)
        "w2": jnp.stack([_pad2d(p["w2"], H1p, H2p) for p in params]),       # (C, H1p, H2p)
        "b2": jnp.stack([_pad2d(p["b2"][None, :], 1, H2p) for p in params]),  # (C, 1, H2p)
        "w3": jnp.stack([_pad2d(p["w3"].T, 1, H2p) for p in params]),       # (C, 1, H2p)
        "b3": jnp.stack([p["b3"].reshape(1, 1) for p in params]),           # (C, 1, 1)
    }
    return packed


@functools.partial(jax.jit, static_argnames=())
def sac_critic_forward(obs, actions, packed):
    """Returns a (n_critics, batch) array of Q-values (one row per critic)."""
    B = obs.shape[0]
    x = jnp.concatenate([obs, actions], axis=1).astype(jnp.float32)  # (B, D)
    D = x.shape[1]

    w1, b1 = packed["w1"], packed["b1"]
    w2, b2 = packed["w2"], packed["b2"]
    w3, b3 = packed["w3"], packed["b3"]
    C, Dp, H1p = w1.shape
    H2p = w2.shape[2]

    Bp = _round_up(B, 8)
    # Only the (tiny) activation tensor is padded per call.
    x_p = jnp.pad(x, ((0, Bp - B), (0, Dp - D)))

    out = pl.pallas_call(
        sac_critic_kernel,
        out_shape=jax.ShapeDtypeStruct((C, Bp, 1), jnp.float32),
        grid_spec=pltpu.PrefetchScalarGridSpec(
            num_scalar_prefetch=0,
            grid=(C,),
            in_specs=[
                pl.BlockSpec((Bp, Dp), lambda i: (0, 0)),        # full-extent x
                pl.BlockSpec((1, Dp, H1p), lambda i: (i, 0, 0)),
                pl.BlockSpec((1, 1, H1p), lambda i: (i, 0, 0)),
                pl.BlockSpec((1, H1p, H2p), lambda i: (i, 0, 0)),
                pl.BlockSpec((1, 1, H2p), lambda i: (i, 0, 0)),
                pl.BlockSpec((1, 1, H2p), lambda i: (i, 0, 0)),
                pl.BlockSpec((1, 1, 1), lambda i: (i, 0, 0)),
            ],
            out_specs=pl.BlockSpec((1, Bp, 1), lambda i: (i, 0, 0)),
        ),
        compiler_params=pltpu.CompilerParams(
            dimension_semantics=("parallel",)),   # critics shard across TCs on v7x
    )(x_p, w1, b1, w2, b2, w3, b3)

    # Un-pad the batch rows; real Q value lives in the single output column.
    return out[:, :B, 0]  # (n_critics, B)


def init_sac_critic_params(key, obs_size, act_size, n_critics=2):
    """Deterministic init matching nn.Linear's U(-1/sqrt(fan_in), 1/sqrt(fan_in))."""
    D = obs_size + act_size
    dims = [(D, _H1), (_H1, _H2), (_H2, 1)]
    params = []
    for _ in range(n_critics):
        p = {}
        for li, (fi, fo) in enumerate(dims, start=1):
            key, kw, kb = jax.random.split(key, 3)
            bound = 1.0 / jnp.sqrt(jnp.float32(fi))
            p[f"w{li}"] = jax.random.uniform(
                kw, (fi, fo), jnp.float32, minval=-bound, maxval=bound)
            p[f"b{li}"] = jax.random.uniform(
                kb, (fo,), jnp.float32, minval=-bound, maxval=bound)
        params.append(p)
    return params


def _reference_forward(obs, actions, params):
    x = jnp.concatenate([obs, actions], axis=1)
    outs = []
    for p in params:
        h1 = jnp.tanh(x @ p["w1"] + p["b1"])
        h2 = jnp.tanh(h1 @ p["w2"] + p["b2"])
        q = h2 @ p["w3"] + p["b3"]
        outs.append(q.reshape(-1))
    return jnp.stack(outs)


if __name__ == "__main__":
    key = jax.random.PRNGKey(0)
    k_obs, k_act, k_par = jax.random.split(key, 3)

    batch, obs_size, act_size = 2, 16, 8
    obs = jax.random.normal(k_obs, (batch, obs_size), jnp.float32)
    actions = jax.random.normal(k_act, (batch, act_size), jnp.float32)
    params = init_sac_critic_params(k_par, obs_size, act_size, n_critics=2)

    # Pad/stack weights once (init-time), not on every forward call.
    packed = jax.block_until_ready(pack_sac_critic_params(params))

    q_kernel = jax.block_until_ready(sac_critic_forward(obs, actions, packed))
    q_ref = _reference_forward(obs, actions, params)

    assert q_kernel.shape == (2, batch)
    assert jnp.allclose(q_kernel, q_ref, atol=1e-5, rtol=1e-5), (
        f"mismatch: {q_kernel} vs {q_ref}")
    print("KERNEL_OK")
</pallas_src>

<mosaic_0001>
module attributes {stable_mosaic.version = 11 : i64} {
  func.func @sac_critic_kernel(%arg0: i32, %arg1: memref<8x24xf32, #tpu.memory_space<vmem>>, %arg2: memref<1x24x512xf32, #tpu.memory_space<vmem>>, %arg3: memref<1x1x512xf32, #tpu.memory_space<vmem>>, %arg4: memref<1x512x384xf32, #tpu.memory_space<vmem>>, %arg5: memref<1x1x384xf32, #tpu.memory_space<vmem>>, %arg6: memref<1x1x384xf32, #tpu.memory_space<vmem>>, %arg7: memref<1x1x1xf32, #tpu.memory_space<vmem>>, %arg8: memref<1x8x1xf32, #tpu.memory_space<vmem>>) attributes {dimension_semantics = [#tpu.dimension_semantics<parallel>], iteration_bounds = array<i64: 2>, scalar_prefetch = 0 : i64, scratch_operands = 0 : i64, tpu.core_type = #tpu.core_type<tc>, window_params = [{pipeline_mode = #tpu.pipeline_mode<synchronous>, transform_indices = @transform_0, window_bounds = array<i64: 8, 24>}, {transform_indices = @transform_1, window_bounds = array<i64: 1, 24, 512>}, {transform_indices = @transform_2, window_bounds = array<i64: 1, 1, 512>}, {transform_indices = @transform_3, window_bounds = array<i64: 1, 512, 384>}, {transform_indices = @transform_4, window_bounds = array<i64: 1, 1, 384>}, {transform_indices = @transform_5, window_bounds = array<i64: 1, 1, 384>}, {transform_indices = @transform_6, window_bounds = array<i64: 1, 1, 1>}, {transform_indices = @transform_7, window_bounds = array<i64: 1, 8, 1>}]} {
    %c0 = arith.constant 0 : index
    %c0_0 = arith.constant 0 : index
    %0 = vector.load %arg1[%c0, %c0_0] : memref<8x24xf32, #tpu.memory_space<vmem>>, vector<8x24xf32>
    %c0_1 = arith.constant 0 : index
    %c0_2 = arith.constant 0 : index
    %c0_3 = arith.constant 0 : index
    %1 = vector.load %arg2[%c0_1, %c0_2, %c0_3] : memref<1x24x512xf32, #tpu.memory_space<vmem>>, vector<1x24x512xf32>
    %2 = vector.shape_cast %1 : vector<1x24x512xf32> to vector<24x512xf32>
    %cst = arith.constant dense<0.000000e+00> : vector<8x512xf32>
    %3 = tpu.matmul %0, %2, %cst {dimension_numbers = #tpu.dot_dimension_numbers<[1], [0], [0], [1], [0, 0, 1, 1], [], []>} : vector<8x24xf32>, vector<24x512xf32>, vector<8x512xf32> -> vector<8x512xf32>
    %c0_4 = arith.constant 0 : index
    %c0_5 = arith.constant 0 : index
    %c0_6 = arith.constant 0 : index
    %4 = vector.load %arg3[%c0_4, %c0_5, %c0_6] : memref<1x1x512xf32, #tpu.memory_space<vmem>>, vector<1x1x512xf32>
    %5 = vector.shape_cast %4 : vector<1x1x512xf32> to vector<1x512xf32>
    %6 = vector.broadcast %5 : vector<1x512xf32> to vector<8x512xf32>
    %7 = arith.addf %3, %6 : vector<8x512xf32>
    %8 = math.tanh %7 : vector<8x512xf32>
    %c0_7 = arith.constant 0 : index
    %c0_8 = arith.constant 0 : index
    %c0_9 = arith.constant 0 : index
    %9 = vector.load %arg4[%c0_7, %c0_8, %c0_9] : memref<1x512x384xf32, #tpu.memory_space<vmem>>, vector<1x512x384xf32>
    %10 = vector.shape_cast %9 : vector<1x512x384xf32> to vector<512x384xf32>
    %cst_10 = arith.constant dense<0.000000e+00> : vector<8x384xf32>
    %11 = tpu.matmul %8, %10, %cst_10 {dimension_numbers = #tpu.dot_dimension_numbers<[1], [0], [0], [1], [0, 0, 1, 1], [], []>} : vector<8x512xf32>, vector<512x384xf32>, vector<8x384xf32> -> vector<8x384xf32>
    %c0_11 = arith.constant 0 : index
    %c0_12 = arith.constant 0 : index
    %c0_13 = arith.constant 0 : index
    %12 = vector.load %arg5[%c0_11, %c0_12, %c0_13] : memref<1x1x384xf32, #tpu.memory_space<vmem>>, vector<1x1x384xf32>
    %13 = vector.shape_cast %12 : vector<1x1x384xf32> to vector<1x384xf32>
    %14 = vector.broadcast %13 : vector<1x384xf32> to vector<8x384xf32>
    %15 = arith.addf %11, %14 : vector<8x384xf32>
    %16 = math.tanh %15 : vector<8x384xf32>
    %c0_14 = arith.constant 0 : index
    %c0_15 = arith.constant 0 : index
    %c0_16 = arith.constant 0 : index
    %17 = vector.load %arg6[%c0_14, %c0_15, %c0_16] : memref<1x1x384xf32, #tpu.memory_space<vmem>>, vector<1x1x384xf32>
    %18 = vector.shape_cast %17 : vector<1x1x384xf32> to vector<1x384xf32>
    %19 = vector.broadcast %18 : vector<1x384xf32> to vector<8x384xf32>
    %20 = arith.mulf %16, %19 : vector<8x384xf32>
    %cst_17 = arith.constant dense<0.000000e+00> : vector<8xf32>
    %21 = vector.multi_reduction <add>, %20, %cst_17 [1] : vector<8x384xf32> to vector<8xf32>
    %22 = vector.shape_cast %21 : vector<8xf32> to vector<8x1xf32>
    %c0_18 = arith.constant 0 : index
    %c0_19 = arith.constant 0 : index
    %c0_20 = arith.constant 0 : index
    %23 = vector.load %arg7[%c0_18, %c0_19, %c0_20] : memref<1x1x1xf32, #tpu.memory_space<vmem>>, vector<1x1x1xf32>
    %24 = vector.shape_cast %23 : vector<1x1x1xf32> to vector<1x1xf32>
    %25 = vector.broadcast %24 : vector<1x1xf32> to vector<8x1xf32>
    %26 = arith.addf %22, %25 : vector<8x1xf32>
    %c0_21 = arith.constant 0 : index
    %c0_22 = arith.constant 0 : index
    %c0_23 = arith.constant 0 : index
    %27 = vector.load %arg8[%c0_21, %c0_22, %c0_23] : memref<1x8x1xf32, #tpu.memory_space<vmem>>, vector<1x8x1xf32>
    %28 = vector.shape_cast %27 : vector<1x8x1xf32> to vector<8x1xf32>
    %29 = vector.shape_cast %26 : vector<8x1xf32> to vector<1x8x1xf32>
    tpu.vector_store %arg8[%c0_21, %c0_22, %c0_23], %29 {strides = array<i32>} : memref<1x8x1xf32, #tpu.memory_space<vmem>>, vector<1x8x1xf32>,
    return
  }
  func.func @transform_0(%arg0: i32) -> (i32, i32) {
    %c0_i32 = arith.constant 0 : i32
    %c0_i32_0 = arith.constant 0 : i32
    %c0_i32_1 = arith.constant 0 : i32
    return %c0_i32, %c0_i32_0 : i32, i32
  }
  func.func @transform_1(%arg0: i32) -> (i32, i32, i32) {
    %c0_i32 = arith.constant 0 : i32
    %c0_i32_0 = arith.constant 0 : i32
    %c0_i32_1 = arith.constant 0 : i32
    return %arg0, %c0_i32, %c0_i32_0 : i32, i32, i32
  }
  func.func @transform_2(%arg0: i32) -> (i32, i32, i32) {
    %c0_i32 = arith.constant 0 : i32
    %c0_i32_0 = arith.constant 0 : i32
    %c0_i32_1 = arith.constant 0 : i32
    return %arg0, %c0_i32, %c0_i32_0 : i32, i32, i32
  }
  func.func @transform_3(%arg0: i32) -> (i32, i32, i32) {
    %c0_i32 = arith.constant 0 : i32
    %c0_i32_0 = arith.constant 0 : i32
    %c0_i32_1 = arith.constant 0 : i32
    return %arg0, %c0_i32, %c0_i32_0 : i32, i32, i32
  }
  func.func @transform_4(%arg0: i32) -> (i32, i32, i32) {
    %c0_i32 = arith.constant 0 : i32
    %c0_i32_0 = arith.constant 0 : i32
    %c0_i32_1 = arith.constant 0 : i32
    return %arg0, %c0_i32, %c0_i32_0 : i32, i32, i32
  }
  func.func @transform_5(%arg0: i32) -> (i32, i32, i32) {
    %c0_i32 = arith.constant 0 : i32
    %c0_i32_0 = arith.constant 0 : i32
    %c0_i32_1 = arith.constant 0 : i32
    return %arg0, %c0_i32, %c0_i32_0 : i32, i32, i32
  }
  func.func @transform_6(%arg0: i32) -> (i32, i32, i32) {
    %c0_i32 = arith.constant 0 : i32
    %c0_i32_0 = arith.constant 0 : i32
    %c0_i32_1 = arith.constant 0 : i32
    return %arg0, %c0_i32, %c0_i32_0 : i32, i32, i32
  }
  func.func @transform_7(%arg0: i32) -> (i32, i32, i32) {
    %c0_i32 = arith.constant 0 : i32
    %c0_i32_0 = arith.constant 0 : i32
    %c0_i32_1 = arith.constant 0 : i32
    return %arg0, %c0_i32, %c0_i32_0 : i32, i32, i32
  }
}

</mosaic_0001>

<llo_original>
// kernel: sac_critic_forward.1
$region0: #{sac_critic_forward.1}
  #allocation0 [shape = 'u32[]', space=smem, size = 0x4, offset = 0x4, fixed_abs, tag = 'smem constant byte address 0x4 - core index']
  #allocation1 [shape = 'u32[144,128]{1,0:T(1,128)}', space=vmem, size = 0x12000, scoped, tag = 'internal scratch']
  %s0 = inlined_call_operand.vmem [shape: f32[8,24], index: 0, kind: input, shape index: {}]
  %s1 = inlined_call_operand.hbm [shape: f32[2,24,512], index: 1, kind: input, shape index: {}]
  %s2 = inlined_call_operand.hbm [shape: f32[2,1,512], index: 2, kind: input, shape index: {}]
  %s3 = inlined_call_operand.hbm [shape: f32[2,512,384], index: 3, kind: input, shape index: {}]
  %s4 = inlined_call_operand.hbm [shape: f32[2,1,384], index: 4, kind: input, shape index: {}]
  %s5 = inlined_call_operand.hbm [shape: f32[2,1,384], index: 5, kind: input, shape index: {}]
  %s6 = inlined_call_operand.vmem [shape: f32[2,1,1], index: 6, kind: input, shape index: {}]
  %s7 = inlined_call_operand.vmem [shape: f32[2,8,1], index: 7, kind: output, shape index: {}]
  %s8 = sld [smem:[#allocation0]]
  $region81: #{sac_critic_forward.1} parent=0
    _
  %s10 = ssub.s32 1, %s8
  %s11 = scalar_select 0, %s10, %s8
  $region1: #{sac_critic_forward.1} parent=0
    #allocation2 [shape = 'u8[98304]{0}', space=vmem, size = 0x18000, scoped, tag = 'input window, operand 1']
    #allocation3 [shape = 's32[2]{0}', space=sflag, size = 0x8, scoped, tag = 'scoped memory for sac_critic_forward.1']
    #allocation4 [shape = 'u8[4096]{0}', space=vmem, size = 0x1000, scoped, tag = 'input window, operand 2']
    #allocation5 [shape = 's32[2]{0}', space=sflag, size = 0x8, scoped, tag = 'scoped memory for sac_critic_forward.1']
    #allocation6 [shape = 'u8[1572864]{0}', space=vmem, size = 0x180000, scoped, tag = 'input window, operand 3']
    #allocation7 [shape = 'u8[3072]{0}', space=vmem, size = 0xc00, scoped, tag = 'input window, operand 4']
    #allocation8 [shape = 's32[2]{0}', space=sflag, size = 0x8, scoped, tag = 'scoped memory for sac_critic_forward.1']
    #allocation9 [shape = 'u8[3072]{0}', space=vmem, size = 0xc00, scoped, tag = 'input window, operand 5']
    %12 = vsyncpa [#allocation3], 0
    %s13 = scalar_lea.sflag [#allocation3], 1
    %14 = vsyncpa %s13, 0
    %15 = vsyncpa [#allocation5], 0
    %s16 = scalar_lea.sflag [#allocation5], 1
    %17 = vsyncpa %s16, 0
    %18 = vsyncpa [#allocation8], 0
    %s19 = scalar_lea.sflag [#allocation8], 1
    %20 = vsyncpa %s19, 0
    loop: start=0, step=1, limit=4
    $region2: #{sac_critic_forward.1} parent=1 // loop_pre_header
      _
    $region3: #{sac_critic_forward.1} parent=1 // loop_header
      %s22 = sphi 0, %s26
      %p23 = scmp.ge.s32.totalorder %s22, 4
      %s30 = sphi 0, %s30
      %s32 = sphi 0, %s30
      %s33 = sphi 0, %s32
      %s47 = sphi 0, %s33
      %s53 = sphi 0, %s55
      %s56 = sphi 0, %s53
      %s57 = sphi 0, %s56
      %s73 = sphi 0, %s57
      %s79 = sphi 0, %s81
      %s82 = sphi 0, %s79
      %s83 = sphi 0, %s82
      %s99 = sphi 0, %s83
      %s105 = sphi 0, %s107
      %s108 = sphi 0, %s105
      %s109 = sphi 0, %s108
      %s125 = sphi 0, %s109
      %s131 = sphi 0, %s133
      %s134 = sphi 0, %s131
      %s135 = sphi 0, %s134
      %s151 = sphi 0, %s135
      %s157 = sphi 0, %s159
      %s160 = sphi 0, %s157
      %s161 = sphi 0, %s160
      %s177 = sphi 0, %s161
      %s183 = sphi 0, %s185
      %s186 = sphi 0, %s183
      %s187 = sphi 0, %s186
      %s203 = sphi 0, %s187
      %s209 = sphi 0, %s211
      %s212 = sphi 0, %s209
      %s213 = sphi 0, %s212
      %s229 = sphi 0, %s213
    $region4: #{sac_critic_forward.1} parent=1 // loop_header_branch
      %25 = sbr.rel (%p23) target = $region8
    $region5: #{sac_critic_forward.1} parent=1 // loop_body
      %s27 = ssub.s32 %s22, 1
      %s28 = ssub.s32 %s22, 2
      %s29 = sadd.s32 %s22, 1
      %s31 = sadd.s32 %s30, 1
      %p34 = scmp.eq.s32.totalorder %s22, 1
      %p35 = scmp.ne.s32.totalorder %s30, %s32
      %p36 = scmp.eq.s32.totalorder %s22, 0
      %p37 = por %p35, %p36
      %p38 = scmp.ne.s32.totalorder %s30, %s32
      %p39 = scmp.eq.s32.totalorder %s27, 1
      %p40 = por %p38, %p39
      %p41 = scmp.ne.s32.totalorder %s32, %s33
      %p42 = scmp.eq.s32.totalorder %s27, 0
      %p43 = por %p41, %p42
      %p44 = scmp.ne.s32.totalorder %s32, %s33
      %p45 = scmp.eq.s32.totalorder %s28, 1
      %p46 = por %p44, %p45
      %p48 = scmp.ne.s32.totalorder %s33, %s47
      %p49 = scmp.eq.s32.totalorder %s28, 0
      %p50 = por %p48, %p49
      %s51 = ssub.s32 %s22, %s29
      %p52 = scmp.eq.s32.totalorder %s51, 0
      %s54 = sadd.s32 %s53, 1
      %s55 = scalar_select %p52, %s53, %s54
      %p58 = pneg %p52
      %p59 = scmp.eq.s32.totalorder %s22, 1
      %p60 = por %p58, %p59
      %p61 = scmp.ne.s32.totalorder %s53, %s56
      %p62 = scmp.eq.s32.totalorder %s22, 0
      %p63 = por %p61, %p62
      %p64 = scmp.ne.s32.totalorder %s53, %s56
      %p65 = scmp.eq.s32.totalorder %s27, 1
      %p66 = por %p64, %p65
      %p67 = scmp.ne.s32.totalorder %s56, %s57
      %p68 = scmp.eq.s32.totalorder %s27, 0
      %p69 = por %p67, %p68
      %p70 = scmp.ne.s32.totalorder %s56, %s57
      %p71 = scmp.eq.s32.totalorder %s28, 1
      %p72 = por %p70, %p71
      %p74 = scmp.ne.s32.totalorder %s57, %s73
      %p75 = scmp.eq.s32.totalorder %s28, 0
      %p76 = por %p74, %p75
      %s77 = ssub.s32 %s22, %s29
      %p78 = scmp.eq.s32.totalorder %s77, 0
      %s80 = sadd.s32 %s79, 1
      %s81 = scalar_select %p78, %s79, %s80
      %p84 = pneg %p78
      %p85 = scmp.eq.s32.totalorder %s22, 1
      %p86 = por %p84, %p85
      %p87 = scmp.ne.s32.totalorder %s79, %s82
      %p88 = scmp.eq.s32.totalorder %s22, 0
      %p89 = por %p87, %p88
      %p90 = scmp.ne.s32.totalorder %s79, %s82
      %p91 = scmp.eq.s32.totalorder %s27, 1
      %p92 = por %p90, %p91
      %p93 = scmp.ne.s32.totalorder %s82, %s83
      %p94 = scmp.eq.s32.totalorder %s27, 0
      %p95 = por %p93, %p94
      %p96 = scmp.ne.s32.totalorder %s82, %s83
      %p97 = scmp.eq.s32.totalorder %s28, 1
      %p98 = por %p96, %p97
      %p100 = scmp.ne.s32.totalorder %s83, %s99
      %p101 = scmp.eq.s32.totalorder %s28, 0
      %p102 = por %p100, %p101
      %s103 = ssub.s32 %s22, %s29
      %p104 = scmp.eq.s32.totalorder %s103, 0
      %s106 = sadd.s32 %s105, 1
      %s107 = scalar_select %p104, %s105, %s106
      %p110 = pneg %p104
      %p111 = scmp.eq.s32.totalorder %s22, 1
      %p112 = por %p110, %p111
      %p113 = scmp.ne.s32.totalorder %s105, %s108
      %p114 = scmp.eq.s32.totalorder %s22, 0
      %p115 = por %p113, %p114
      %p116 = scmp.ne.s32.totalorder %s105, %s108
      %p117 = scmp.eq.s32.totalorder %s27, 1
      %p118 = por %p116, %p117
      %p119 = scmp.ne.s32.totalorder %s108, %s109
      %p120 = scmp.eq.s32.totalorder %s27, 0
      %p121 = por %p119, %p120
      %p122 = scmp.ne.s32.totalorder %s108, %s109
      %p123 = scmp.eq.s32.totalorder %s28, 1
      %p124 = por %p122, %p123
      %p126 = scmp.ne.s32.totalorder %s109, %s125
      %p127 = scmp.eq.s32.totalorder %s28, 0
      %p128 = por %p126, %p127
      %s129 = ssub.s32 %s22, %s29
      %p130 = scmp.eq.s32.totalorder %s129, 0
      %s132 = sadd.s32 %s131, 1
      %s133 = scalar_select %p130, %s131, %s132
      %p136 = pneg %p130
      %p137 = scmp.eq.s32.totalorder %s22, 1
      %p138 = por %p136, %p137
      %p139 = scmp.ne.s32.totalorder %s131, %s134
      %p140 = scmp.eq.s32.totalorder %s22, 0
      %p141 = por %p139, %p140
      %p142 = scmp.ne.s32.totalorder %s131, %s134
      %p143 = scmp.eq.s32.totalorder %s27, 1
      %p144 = por %p142, %p143
      %p145 = scmp.ne.s32.totalorder %s134, %s135
      %p146 = scmp.eq.s32.totalorder %s27, 0
      %p147 = por %p145, %p146
      %p148 = scmp.ne.s32.totalorder %s134, %s135
      %p149 = scmp.eq.s32.totalorder %s28, 1
      %p150 = por %p148, %p149
      %p152 = scmp.ne.s32.totalorder %s135, %s151
      %p153 = scmp.eq.s32.totalorder %s28, 0
      %p154 = por %p152, %p153
      %s155 = ssub.s32 %s22, %s29
      %p156 = scmp.eq.s32.totalorder %s155, 0
      %s158 = sadd.s32 %s157, 1
      %s159 = scalar_select %p156, %s157, %s158
      %p162 = pneg %p156
      %p163 = scmp.eq.s32.totalorder %s22, 1
      %p164 = por %p162, %p163
      %p165 = scmp.ne.s32.totalorder %s157, %s160
      %p166 = scmp.eq.s32.totalorder %s22, 0
      %p167 = por %p165, %p166
      %p168 = scmp.ne.s32.totalorder %s157, %s160
      %p169 = scmp.eq.s32.totalorder %s27, 1
      %p170 = por %p168, %p169
      %p171 = scmp.ne.s32.totalorder %s160, %s161
      %p172 = scmp.eq.s32.totalorder %s27, 0
      %p173 = por %p171, %p172
      %p174 = scmp.ne.s32.totalorder %s160, %s161
      %p175 = scmp.eq.s32.totalorder %s28, 1
      %p176 = por %p174, %p175
      %p178 = scmp.ne.s32.totalorder %s161, %s177
      %p179 = scmp.eq.s32.totalorder %s28, 0
      %p180 = por %p178, %p179
      %s181 = ssub.s32 %s22, %s29
      %p182 = scmp.eq.s32.totalorder %s181, 0
      %s184 = sadd.s32 %s183, 1
      %s185 = scalar_select %p182, %s183, %s184
      %p188 = pneg %p182
      %p189 = scmp.eq.s32.totalorder %s22, 1
      %p190 = por %p188, %p189
      %p191 = scmp.ne.s32.totalorder %s183, %s186
      %p192 = scmp.eq.s32.totalorder %s22, 0
      %p193 = por %p191, %p192
      %p194 = scmp.ne.s32.totalorder %s183, %s186
      %p195 = scmp.eq.s32.totalorder %s27, 1
      %p196 = por %p194, %p195
      %p197 = scmp.ne.s32.totalorder %s186, %s187
      %p198 = scmp.eq.s32.totalorder %s27, 0
      %p199 = por %p197, %p198
      %p200 = scmp.ne.s32.totalorder %s186, %s187
      %p201 = scmp.eq.s32.totalorder %s28, 1
      %p202 = por %p200, %p201
      %p204 = scmp.ne.s32.totalorder %s187, %s203
      %p205 = scmp.eq.s32.totalorder %s28, 0
      %p206 = por %p204, %p205
      %s207 = ssub.s32 %s22, %s29
      %p208 = scmp.eq.s32.totalorder %s207, 0
      %s210 = sadd.s32 %s209, 1
      %s211 = scalar_select %p208, %s209, %s210
      %p214 = pneg %p208
      %p215 = scmp.eq.s32.totalorder %s22, 1
      %p216 = por %p214, %p215
      %p217 = scmp.ne.s32.totalorder %s209, %s212
      %p218 = scmp.eq.s32.totalorder %s22, 0
      %p219 = por %p217, %p218
      %p220 = scmp.ne.s32.totalorder %s209, %s212
      %p221 = scmp.eq.s32.totalorder %s27, 1
      %p222 = por %p220, %p221
      %p223 = scmp.ne.s32.totalorder %s212, %s213
      %p224 = scmp.eq.s32.totalorder %s27, 0
      %p225 = por %p223, %p224
      %p226 = scmp.ne.s32.totalorder %s212, %s213
      %p227 = scmp.eq.s32.totalorder %s28, 1
      %p228 = por %p226, %p227
      %p230 = scmp.ne.s32.totalorder %s213, %s229
      %p231 = scmp.eq.s32.totalorder %s28, 0
      %p232 = por %p230, %p231
      %p233 = scmp.le.s32.totalorder 1, %s22
      %p234 = scmp.lt.s32.totalorder %s22, 3
      %p235 = pnand %p233, %p234
      %p236 = pneg %p235
      // Predicated region
      $region9: #{sac_critic_forward.1} parent=5 // pred_check
        _
      $region10: #{sac_critic_forward.1} parent=5 // pred_check_branch
        %238 = sbr.rel (%p235) target = $region12
      $region11: #{sac_critic_forward.1} parent=5 // pred_region
        %s239 = ssub.s32 %s22, 1
        // Predicated region
        $region13: #{sac_critic_forward.1} parent=11 // pred_check
          %p240 = pneg %p43
        $region14: #{sac_critic_forward.1} parent=11 // pred_check_branch
          %242 = sbr.rel (%p240) target = $region16
        $region15: #{sac_critic_forward.1} parent=11 // pred_region
          _
        $region16: #{sac_critic_forward.1} parent=11 // pred_fallthru
          _
      $region12: #{sac_critic_forward.1} parent=5 // pred_fallthru
        _
      %p243 = scmp.lt.s32.totalorder %s22, 2
      // Predicated region
      $region17: #{sac_critic_forward.1} parent=5 // pred_check
        %p244 = pneg %p243
      $region18: #{sac_critic_forward.1} parent=5 // pred_check_branch
        %246 = sbr.rel (%p244) target = $region20
      $region19: #{sac_critic_forward.1} parent=5 // pred_region
        // Predicated region
        $region21: #{sac_critic_forward.1} parent=19 // pred_check
          %p247 = pneg %p63
        $region22: #{sac_critic_forward.1} parent=19 // pred_check_branch
          %249 = sbr.rel (%p247) target = $region24
        $region23: #{sac_critic_forward.1} parent=19 // pred_region
          %s250 = sand.u32 %s53, 1
          %s251 = scalar_lea.sflag [#allocation3], %s250
          %s252 = sand.u32 %s53, 1
          %s253 = smul.addr %s252, 96
          %s254 = scalar_lea.vmem [#allocation2], %s253
          %s256 = ssub.s32 1536, 1536
          %257 = vsyncadd %s251, %s256
          %s258 = smul.addr %s22, 12
          %s259 = smul.addr %s258, 128
          %s260 = scalar_lea.hbm %s1, %s259
          %s261 = sshll.u32 %s254, 4
          %s262 = int_to_ptr.vmem [resolvable:$true] %s261
          %267 = dma.hbm_to_vmem [thread:$0]  %s260, 1536, %s262, %s251, 512, 512, 32
        $region24: #{sac_critic_forward.1} parent=19 // pred_fallthru
          _
        // Predicated region
        $region25: #{sac_critic_forward.1} parent=19 // pred_check
          %p268 = pneg %p89
        $region26: #{sac_critic_forward.1} parent=19 // pred_check_branch
          %270 = sbr.rel (%p268) target = $region28
        $region27: #{sac_critic_forward.1} parent=19 // pred_region
          %s271 = sand.u32 %s22, 1
          %s272 = scalar_lea.sflag [#allocation5], %s271
          %s273 = sand.u32 %s79, 1
          %s274 = smul.addr %s273, 4
          %s275 = scalar_lea.vmem [#allocation4], %s274
          %s277 = ssub.s32 64, 64
          %278 = vsyncadd %s272, %s277
          %s279 = smul.addr %s22, 4
          %s280 = smul.addr %s279, 16
          %s281 = scalar_lea.hbm %s2, %s280
          %s283 = sshll.u32 %s275, 4
          %s284 = int_to_ptr.vmem [resolvable:$true] %s283
          %286 = dma.hbm_to_vmem [thread:$0]  %s281, 64, %s284, %s272
        $region28: #{sac_critic_forward.1} parent=19 // pred_fallthru
          _
        // Predicated region
        $region29: #{sac_critic_forward.1} parent=19 // pred_check
          %p287 = pneg %p115
        $region30: #{sac_critic_forward.1} parent=19 // pred_check_branch
          %289 = sbr.rel (%p287) target = $region32
        $region31: #{sac_critic_forward.1} parent=19 // pred_region
          %s290 = sand.u32 %s22, 1
          %s291 = scalar_lea.sflag [#allocation5], %s290
          %s292 = sand.u32 %s105, 1
          %s293 = smul.addr %s292, 1536
          %s294 = scalar_lea.vmem [#allocation6], %s293
          %s296 = ssub.s32 24576, 24576
          %297 = vsyncadd %s291, %s296
          %s298 = smul.addr %s22, 192
          %s299 = smul.addr %s298, 128
          %s300 = scalar_lea.hbm %s3, %s299
          %s301 = sshll.u32 %s294, 4
          %s302 = int_to_ptr.vmem [resolvable:$true] %s301
          %307 = dma.hbm_to_vmem [thread:$0]  %s300, 24576, %s302, %s291, 384, 384, 24
        $region32: #{sac_critic_forward.1} parent=19 // pred_fallthru
          _
        // Predicated region
        $region33: #{sac_critic_forward.1} parent=19 // pred_check
          %p308 = pneg %p141
        $region34: #{sac_critic_forward.1} parent=19 // pred_check_branch
          %310 = sbr.rel (%p308) target = $region36
        $region35: #{sac_critic_forward.1} parent=19 // pred_region
          %s311 = sand.u32 %s22, 1
          %s312 = scalar_lea.sflag [#allocation8], %s311
          %s313 = sand.u32 %s131, 1
          %s314 = smul.addr %s313, 3
          %s315 = scalar_lea.vmem [#allocation7], %s314
          %s317 = ssub.s32 48, 48
          %318 = vsyncadd %s312, %s317
          %s319 = smul.addr %s22, 3
          %s320 = smul.addr %s319, 16
          %s321 = scalar_lea.hbm %s4, %s320
          %s323 = sshll.u32 %s315, 4
          %s324 = int_to_ptr.vmem [resolvable:$true] %s323
          %326 = dma.hbm_to_vmem [thread:$0]  %s321, 48, %s324, %s312
        $region36: #{sac_critic_forward.1} parent=19 // pred_fallthru
          _
        // Predicated region
        $region37: #{sac_critic_forward.1} parent=19 // pred_check
          %p327 = pneg %p167
        $region38: #{sac_critic_forward.1} parent=19 // pred_check_branch
          %329 = sbr.rel (%p327) target = $region40
        $region39: #{sac_critic_forward.1} parent=19 // pred_region
          %s330 = sand.u32 %s22, 1
          %s331 = scalar_lea.sflag [#allocation8], %s330
          %s332 = sand.u32 %s157, 1
          %s333 = smul.addr %s332, 3
          %s334 = scalar_lea.vmem [#allocation9], %s333
          %s336 = ssub.s32 48, 48
          %337 = vsyncadd %s331, %s336
          %s338 = smul.addr %s22, 3
          %s339 = smul.addr %s338, 16
          %s340 = scalar_lea.hbm %s5, %s339
          %s342 = sshll.u32 %s334, 4
          %s343 = int_to_ptr.vmem [resolvable:$true] %s342
          %345 = dma.hbm_to_vmem [thread:$0]  %s340, 48, %s343, %s331
        $region40: #{sac_critic_forward.1} parent=19 // pred_fallthru
          _
        // Predicated region
        $region41: #{sac_critic_forward.1} parent=19 // pred_check
          %p346 = pneg %p193
        $region42: #{sac_critic_forward.1} parent=19 // pred_check_branch
          %348 = sbr.rel (%p346) target = $region44
        $region43: #{sac_critic_forward.1} parent=19 // pred_region
          %p349 = scmp.lt.s32.totalorder %s22, 1
          %s350 = scalar_select %p349, %s22, 1
          %s351 = scalar_lea.vmem %s6, %s350
        $region44: #{sac_critic_forward.1} parent=19 // pred_fallthru
          _
      $region20: #{sac_critic_forward.1} parent=5 // pred_fallthru
        _
      %p352 = scmp.le.s32.totalorder 1, %s22
      %p353 = scmp.lt.s32.totalorder %s22, 3
      %p354 = pnand %p352, %p353
      %p355 = pneg %p354
      // Predicated region
      $region45: #{sac_critic_forward.1} parent=5 // pred_check
        _
      $region46: #{sac_critic_forward.1} parent=5 // pred_check_branch
        %357 = sbr.rel (%p354) target = $region48
      $region47: #{sac_critic_forward.1} parent=5 // pred_region
        %s358 = ssub.s32 %s22, 1
        %s359 = sand.u32 %s56, 1
        %s360 = scalar_lea.sflag [#allocation3], %s359
        %s361 = sand.u32 %s56, 1
        %s362 = smul.addr %s361, 96
        %s363 = scalar_lea.vmem [#allocation2], %s362
        // Predicated region
        $region49: #{sac_critic_forward.1} parent=47 // pred_check
          %p364 = pneg %p69
        $region50: #{sac_critic_forward.1} parent=47 // pred_check_branch
          %366 = sbr.rel (%p364) target = $region52
        $region51: #{sac_critic_forward.1} parent=47 // pred_region
          %367 = dma.done %s360, 1536
        $region52: #{sac_critic_forward.1} parent=47 // pred_fallthru
          _
        %s368 = sand.u32 %s27, 1
        %s369 = scalar_lea.sflag [#allocation5], %s368
        %s370 = sand.u32 %s82, 1
        %s371 = smul.addr %s370, 4
        %s372 = scalar_lea.vmem [#allocation4], %s371
        // Predicated region
        $region53: #{sac_critic_forward.1} parent=47 // pred_check
          %p373 = pneg %p95
        $region54: #{sac_critic_forward.1} parent=47 // pred_check_branch
          %375 = sbr.rel (%p373) target = $region56
        $region55: #{sac_critic_forward.1} parent=47 // pred_region
          %376 = dma.done %s369, 64
        $region56: #{sac_critic_forward.1} parent=47 // pred_fallthru
          _
        %s377 = sand.u32 %s27, 1
        %s378 = scalar_lea.sflag [#allocation5], %s377
        %s379 = sand.u32 %s108, 1
        %s380 = smul.addr %s379, 1536
        %s381 = scalar_lea.vmem [#allocation6], %s380
        // Predicated region
        $region57: #{sac_critic_forward.1} parent=47 // pred_check
          %p382 = pneg %p121
        $region58: #{sac_critic_forward.1} parent=47 // pred_check_branch
          %384 = sbr.rel (%p382) target = $region60
        $region59: #{sac_critic_forward.1} parent=47 // pred_region
          %385 = dma.done %s378, 24576
        $region60: #{sac_critic_forward.1} parent=47 // pred_fallthru
          _
        %s386 = sand.u32 %s27, 1
        %s387 = scalar_lea.sflag [#allocation8], %s386
        %s388 = sand.u32 %s134, 1
        %s389 = smul.addr %s388, 3
        %s390 = scalar_lea.vmem [#allocation7], %s389
        // Predicated region
        $region61: #{sac_critic_forward.1} parent=47 // pred_check
          %p391 = pneg %p147
        $region62: #{sac_critic_forward.1} parent=47 // pred_check_branch
          %393 = sbr.rel (%p391) target = $region64
        $region63: #{sac_critic_forward.1} parent=47 // pred_region
          %394 = dma.done %s387, 48
        $region64: #{sac_critic_forward.1} parent=47 // pred_fallthru
          _
        %s395 = sand.u32 %s27, 1
        %s396 = scalar_lea.sflag [#allocation8], %s395
        %s397 = sand.u32 %s160, 1
        %s398 = smul.addr %s397, 3
        %s399 = scalar_lea.vmem [#allocation9], %s398
        // Predicated region
        $region65: #{sac_critic_forward.1} parent=47 // pred_check
          %p400 = pneg %p173
        $region66: #{sac_critic_forward.1} parent=47 // pred_check_branch
          %402 = sbr.rel (%p400) target = $region68
        $region67: #{sac_critic_forward.1} parent=47 // pred_region
          %403 = dma.done %s396, 48
        $region68: #{sac_critic_forward.1} parent=47 // pred_fallthru
          _
        %p404 = pneg %p43
        %p405 = pneg %p40
        %s406 = sand.u32 %s56, 1
        %s407 = scalar_lea.sflag [#allocation3], %s406
        %s408 = sand.u32 %s56, 1
        %s409 = smul.addr %s408, 96
        %s410 = scalar_lea.vmem [#allocation2], %s409
        %p411 = pneg %p69
        %p412 = pneg %p66
        %s413 = sand.u32 %s27, 1
        %s414 = scalar_lea.sflag [#allocation5], %s413
        %s415 = sand.u32 %s82, 1
        %s416 = smul.addr %s415, 4
        %s417 = scalar_lea.vmem [#allocation4], %s416
        %p418 = pneg %p95
        %p419 = pneg %p92
        %s420 = sand.u32 %s27, 1
        %s421 = scalar_lea.sflag [#allocation5], %s420
        %s422 = sand.u32 %s108, 1
        %s423 = smul.addr %s422, 1536
        %s424 = scalar_lea.vmem [#allocation6], %s423
        %p425 = pneg %p121
        %p426 = pneg %p118
        %s427 = sand.u32 %s27, 1
        %s428 = scalar_lea.sflag [#allocation8], %s427
        %s429 = sand.u32 %s134, 1
        %s430 = smul.addr %s429, 3
        %s431 = scalar_lea.vmem [#allocation7], %s430
        %p432 = pneg %p147
        %p433 = pneg %p144
        %s434 = sand.u32 %s27, 1
        %s435 = scalar_lea.sflag [#allocation8], %s434
        %s436 = sand.u32 %s160, 1
        %s437 = smul.addr %s436, 3
        %s438 = scalar_lea.vmem [#allocation9], %s437
        %p439 = pneg %p173
        %p440 = pneg %p170
        %p441 = scmp.lt.s32.totalorder %s27, 1
        %s442 = scalar_select %p441, %s27, 1
        %s443 = scalar_lea.vmem %s6, %s442
        %p444 = pneg %p199
        %p445 = pneg %p196
        %p446 = pneg %p225
        %p447 = pneg %p222
        %p448 = scmp.lt.s32.totalorder %s27, 1
        %s449 = scalar_select %p448, %s27, 1
        %s450 = smul.addr %s449, 8
        %s451 = scalar_lea.vmem %s7, %s450
        %p452 = scmp.lt.s32.totalorder %s27, 1
        %s453 = scalar_select %p452, %s27, 1
        %s454 = scalar_lea.vmem %s6, %s453
        %p455 = scmp.lt.s32.totalorder %s27, 1
        %s456 = scalar_select %p455, %s27, 1
        %s457 = smul.addr %s456, 8
        %s458 = scalar_lea.vmem %s7, %s457
        %v459 = vld [vmem:[%s0] sm:$0xff]
        %v460 = vld [vmem:[%s363] sm:$0xff]
        %v461 = vld [vmem:[%s363 + $0x8] sm:$0xff]
        %v462 = vld [vmem:[%s363 + $0x10] sm:$0xff]
        %v463 = vld [vmem:[%s363 + $0x18] sm:$0xff]
        %v464 = vld [vmem:[%s363 + $0x20] sm:$0xff]
        %v465 = vld [vmem:[%s363 + $0x28] sm:$0xff]
        %v466 = vld [vmem:[%s363 + $0x30] sm:$0xff]
        %v467 = vld [vmem:[%s363 + $0x38] sm:$0xff]
        %v468 = vld [vmem:[%s363 + $0x40] sm:$0xff]
        %v469 = vld [vmem:[%s363 + $0x48] sm:$0xff]
        %v470 = vld [vmem:[%s363 + $0x50] sm:$0xff]
        %v471 = vld [vmem:[%s363 + $0x58] sm:$0xff]
        %v472 = vld [vmem:[%s372] sm:$0xf]
        %v474 = vlaneseq
        %v475 = vshrl.u32 %v474, 7
        %v476 = vsub.s32 0, %v475
        %v477 = vrot.slane %v472, %v476
        %v478 = vlaneseq
        %v479 = vshrl.u32 %v478, 7
        %v480 = vsub.s32 1, %v479
        %v481 = vrot.slane %v472, %v480
        %v482 = vlaneseq
        %v483 = vshrl.u32 %v482, 7
        %v484 = vsub.s32 2, %v483
        %v485 = vrot.slane %v472, %v484
        %v486 = vlaneseq
        %v487 = vshrl.u32 %v486, 7
        %v488 = vsub.s32 3, %v487
        %v489 = vrot.slane %v472, %v488
        %vm494 = vcmask 195584
        %v496 = vsel %vm494, %v459, 0
        %498 = vmatprep.subr.mxu0 0.0
        %499 = vmatpush1.msra.mxu0 0.0
        %500 = vmatprep.subr.mxu0 0.0
        %501 = vmatpush1.msra.mxu0 0.0
        %502 = vmatprep.subr.mxu0 0.0
        %503 = vmatpush1.msra.mxu0 0.0
        %504 = vmatprep.subr.mxu0 0.0
        %505 = vmatpush1.msra.mxu0 0.0
        %506 = vmatprep.subr.mxu0 0.0
        %507 = vmatpush1.msra.mxu0 0.0
        %508 = vmatprep.subr.mxu0 0.0
        %509 = vmatpush1.msra.mxu0 0.0
        %510 = vmatprep.subr.mxu0 0.0
        %511 = vmatpush1.msra.mxu0 0.0
        %512 = vmatprep.subr.mxu0 0.0
        %513 = vmatpush1.msra.mxu0 0.0
        %514 = vmatprep.subr.mxu0 0.0
        %515 = vmatpush1.msra.mxu0 0.0
        %516 = vmatprep.subr.mxu0 0.0
        %517 = vmatpush1.msra.mxu0 0.0
        %518 = vmatprep.subr.mxu0 0.0
        %519 = vmatpush1.msra.mxu0 0.0
        %520 = vmatprep.subr.mxu0 0.0
        %521 = vmatpush1.msra.mxu0 0.0
        %522 = vmatprep.subr.mxu0 0.0
        %523 = vmatpush1.msra.mxu0 0.0
        %524 = vmatprep.subr.mxu0 %v469
        %525 = vmatpush1.msra.mxu0 %v468
        %526 = vmatprep.subr.mxu0 %v465
        %527 = vmatpush1.msra.mxu0 %v464
        %528 = vmatprep.subr.mxu0 %v461
        %529 = vmatpush1.msra.mxu0 %v460
        %530 = vmatprep.subr.mxu0 0.0
        %531 = vmatpush2.msra.mxu0 0.0
        %532 = vmatprep.subr.mxu0 0.0
        %533 = vmatpush2.msra.mxu0 0.0
        %534 = vmatprep.subr.mxu0 0.0
        %535 = vmatpush2.msra.mxu0 0.0
        %536 = vmatprep.subr.mxu0 0.0
        %537 = vmatpush2.msra.mxu0 0.0
        %538 = vmatprep.subr.mxu0 0.0
        %539 = vmatpush2.msra.mxu0 0.0
        %540 = vmatprep.subr.mxu0 0.0
        %541 = vmatpush2.msra.mxu0 0.0
        %542 = vmatprep.subr.mxu0 0.0
        %543 = vmatpush2.msra.mxu0 0.0
        %544 = vmatprep.subr.mxu0 0.0
        %545 = vmatpush2.msra.mxu0 0.0
        %546 = vmatprep.subr.mxu0 0.0
        %547 = vmatpush2.msra.mxu0 0.0
        %548 = vmatprep.subr.mxu0 0.0
        %549 = vmatpush2.msra.mxu0 0.0
        %550 = vmatprep.subr.mxu0 0.0
        %551 = vmatpush2.msra.mxu0 0.0
        %552 = vmatprep.subr.mxu0 0.0
        %553 = vmatpush2.msra.mxu0 0.0
        %554 = vmatprep.subr.mxu0 0.0
        %555 = vmatpush2.msra.mxu0 0.0
        %556 = vmatprep.subr.mxu0 0.0
        %557 = vmatpush2.msra.mxu0 0.0
        %558 = vmatprep.subr.mxu0 0.0
        %559 = vmatpush2.msra.mxu0 0.0
        %560 = vmatprep.subr.mxu0 0.0
        %561 = vmatpush2.msra.mxu0 0.0
        %562 = vmatprep.mubr.f32.mxu0 0.0
        %563 = vmatmul.mubr.f32.gmra.mxu0 %v496
        %v564 = vpop.f32.mrf.mxu0
        %v565 = vadd.f32 %v477, %v564
        %v566 = vpop.f32.mrf.mxu0
        %v567 = vadd.f32 %v481, %v566
        %568 = vdwg.mxu0
        %569 = vmatprep.subr.mxu0 0.0
        %570 = vmatpush1.msra.mxu0 0.0
        %571 = vmatprep.subr.mxu0 0.0
        %572 = vmatpush1.msra.mxu0 0.0
        %573 = vmatprep.subr.mxu0 0.0
        %574 = vmatpush1.msra.mxu0 0.0
        %575 = vmatprep.subr.mxu0 0.0
        %576 = vmatpush1.msra.mxu0 0.0
        %577 = vmatprep.subr.mxu0 0.0
        %578 = vmatpush1.msra.mxu0 0.0
        %579 = vmatprep.subr.mxu0 0.0
        %580 = vmatpush1.msra.mxu0 0.0
        %581 = vmatprep.subr.mxu0 0.0
        %582 = vmatpush1.msra.mxu0 0.0
        %583 = vmatprep.subr.mxu0 0.0
        %584 = vmatpush1.msra.mxu0 0.0
        %585 = vmatprep.subr.mxu0 0.0
        %586 = vmatpush1.msra.mxu0 0.0
        %587 = vmatprep.subr.mxu0 0.0
        %588 = vmatpush1.msra.mxu0 0.0
        %589 = vmatprep.subr.mxu0 0.0
        %590 = vmatpush1.msra.mxu0 0.0
        %591 = vmatprep.subr.mxu0 0.0
        %592 = vmatpush1.msra.mxu0 0.0
        %593 = vmatprep.subr.mxu0 0.0
        %594 = vmatpush1.msra.mxu0 0.0
        %595 = vmatprep.subr.mxu0 %v471
        %596 = vmatpush1.msra.mxu0 %v470
        %597 = vmatprep.subr.mxu0 %v467
        %598 = vmatpush1.msra.mxu0 %v466
        %599 = vmatprep.subr.mxu0 %v463
        %600 = vmatpush1.msra.mxu0 %v462
        %601 = vmatprep.subr.mxu0 0.0
        %602 = vmatpush2.msra.mxu0 0.0
        %603 = vmatprep.subr.mxu0 0.0
        %604 = vmatpush2.msra.mxu0 0.0
        %605 = vmatprep.subr.mxu0 0.0
        %606 = vmatpush2.msra.mxu0 0.0
        %607 = vmatprep.subr.mxu0 0.0
        %608 = vmatpush2.msra.mxu0 0.0
        %609 = vmatprep.subr.mxu0 0.0
        %610 = vmatpush2.msra.mxu0 0.0
        %611 = vmatprep.subr.mxu0 0.0
        %612 = vmatpush2.msra.mxu0 0.0
        %613 = vmatprep.subr.mxu0 0.0
        %614 = vmatpush2.msra.mxu0 0.0
        %615 = vmatprep.subr.mxu0 0.0
        %616 = vmatpush2.msra.mxu0 0.0
        %617 = vmatprep.subr.mxu0 0.0
        %618 = vmatpush2.msra.mxu0 0.0
        %619 = vmatprep.subr.mxu0 0.0
        %620 = vmatpush2.msra.mxu0 0.0
        %621 = vmatprep.subr.mxu0 0.0
        %622 = vmatpush2.msra.mxu0 0.0
        %623 = vmatprep.subr.mxu0 0.0
        %624 = vmatpush2.msra.mxu0 0.0
        %625 = vmatprep.subr.mxu0 0.0
        %626 = vmatpush2.msra.mxu0 0.0
        %627 = vmatprep.subr.mxu0 0.0
        %628 = vmatpush2.msra.mxu0 0.0
        %629 = vmatprep.subr.mxu0 0.0
        %630 = vmatpush2.msra.mxu0 0.0
        %631 = vmatprep.subr.mxu0 0.0
        %632 = vmatpush2.msra.mxu0 0.0
        %633 = vmatprep.mubr.f32.mxu0 0.0
        %634 = vmatmul.mubr.f32.gmra.mxu0 %v496
        %v635 = vpop.f32.mrf.mxu0
        %v636 = vadd.f32 %v485, %v635
        %v637 = vpop.f32.mrf.mxu0
        %v638 = vadd.f32 %v489, %v637
        %639 = vdwg.mxu0
        %v640 = vtanh.pop %v565
        %v641 = vtanh.pop %v567
        %v642 = vtanh.pop %v636
        %v643 = vtanh.pop %v638
        %v644 = vld [vmem:[%s381] sm:$0xff]
        %v645 = vld [vmem:[%s381 + $0x8] sm:$0xff]
        %v646 = vld [vmem:[%s381 + $0x10] sm:$0xff]
        %v647 = vld [vmem:[%s381 + $0x18] sm:$0xff]
        %v648 = vld [vmem:[%s381 + $0x20] sm:$0xff]
        %v649 = vld [vmem:[%s381 + $0x28] sm:$0xff]
        %v650 = vld [vmem:[%s381 + $0x30] sm:$0xff]
        %v651 = vld [vmem:[%s381 + $0x38] sm:$0xff]
        %v652 = vld [vmem:[%s381 + $0x40] sm:$0xff]
        %v653 = vld [vmem:[%s381 + $0x48] sm:$0xff]
        %v654 = vld [vmem:[%s381 + $0x50] sm:$0xff]
        %v655 = vld [vmem:[%s381 + $0x58] sm:$0xff]
        %v656 = vld [vmem:[%s381 + $0x60] sm:$0xff]
        %v657 = vld [vmem:[%s381 + $0x68] sm:$0xff]
        %v658 = vld [vmem:[%s381 + $0x70] sm:$0xff]
        %v659 = vld [vmem:[%s381 + $0x78] sm:$0xff]
        %v660 = vld [vmem:[%s381 + $0x80] sm:$0xff]
        %v661 = vld [vmem:[%s381 + $0x88] sm:$0xff]
        %v662 = vld [vmem:[%s381 + $0x90] sm:$0xff]
        %v663 = vld [vmem:[%s381 + $0x98] sm:$0xff]
        %v664 = vld [vmem:[%s381 + $0xa0] sm:$0xff]
        %v665 = vld [vmem:[%s381 + $0xa8] sm:$0xff]
        %v666 = vld [vmem:[%s381 + $0xb0] sm:$0xff]
        %v667 = vld [vmem:[%s381 + $0xb8] sm:$0xff]
        %v668 = vld [vmem:[%s381 + $0xc0] sm:$0xff]
        %v669 = vld [vmem:[%s381 + $0xc8] sm:$0xff]
        %v670 = vld [vmem:[%s381 + $0xd0] sm:$0xff]
        %v671 = vld [vmem:[%s381 + $0xd8] sm:$0xff]
        %v672 = vld [vmem:[%s381 + $0xe0] sm:$0xff]
        %v673 = vld [vmem:[%s381 + $0xe8] sm:$0xff]
        %v674 = vld [vmem:[%s381 + $0xf0] sm:$0xff]
        %v675 = vld [vmem:[%s381 + $0xf8] sm:$0xff]
        %v676 = vld [vmem:[%s381 + $0x100] sm:$0xff]
        %v677 = vld [vmem:[%s381 + $0x108] sm:$0xff]
        %v678 = vld [vmem:[%s381 + $0x110] sm:$0xff]
        %v679 = vld [vmem:[%s381 + $0x118] sm:$0xff]
        %v680 = vld [vmem:[%s381 + $0x120] sm:$0xff]
        %v681 = vld [vmem:[%s381 + $0x128] sm:$0xff]
        %v682 = vld [vmem:[%s381 + $0x130] sm:$0xff]
        %v683 = vld [vmem:[%s381 + $0x138] sm:$0xff]
        %v684 = vld [vmem:[%s381 + $0x140] sm:$0xff]
        %v685 = vld [vmem:[%s381 + $0x148] sm:$0xff]
        %v686 = vld [vmem:[%s381 + $0x150] sm:$0xff]
        %v687 = vld [vmem:[%s381 + $0x158] sm:$0xff]
        %v688 = vld [vmem:[%s381 + $0x160] sm:$0xff]
        %v689 = vld [vmem:[%s381 + $0x168] sm:$0xff]
        %v690 = vld [vmem:[%s381 + $0x170] sm:$0xff]
        %v691 = vld [vmem:[%s381 + $0x178] sm:$0xff]
        %v692 = vld [vmem:[%s381 + $0x180] sm:$0xff]
        %v693 = vld [vmem:[%s381 + $0x188] sm:$0xff]
        %v694 = vld [vmem:[%s381 + $0x190] sm:$0xff]
        %v695 = vld [vmem:[%s381 + $0x198] sm:$0xff]
        %v696 = vld [vmem:[%s381 + $0x1a0] sm:$0xff]
        %v697 = vld [vmem:[%s381 + $0x1a8] sm:$0xff]
        %v698 = vld [vmem:[%s381 + $0x1b0] sm:$0xff]
        %v699 = vld [vmem:[%s381 + $0x1b8] sm:$0xff]
        %v700 = vld [vmem:[%s381 + $0x1c0] sm:$0xff]
        %v701 = vld [vmem:[%s381 + $0x1c8] sm:$0xff]
        %v702 = vld [vmem:[%s381 + $0x1d0] sm:$0xff]
        %v703 = vld [vmem:[%s381 + $0x1d8] sm:$0xff]
        %v704 = vld [vmem:[%s381 + $0x1e0] sm:$0xff]
        %v705 = vld [vmem:[%s381 + $0x1e8] sm:$0xff]
        %v706 = vld [vmem:[%s381 + $0x1f0] sm:$0xff]
        %v707 = vld [vmem:[%s381 + $0x1f8] sm:$0xff]
        %v708 = vld [vmem:[%s381 + $0x200] sm:$0xff]
        %v709 = vld [vmem:[%s381 + $0x208] sm:$0xff]
        %v710 = vld [vmem:[%s381 + $0x210] sm:$0xff]
        %v711 = vld [vmem:[%s381 + $0x218] sm:$0xff]
        %v712 = vld [vmem:[%s381 + $0x220] sm:$0xff]
        %v713 = vld [vmem:[%s381 + $0x228] sm:$0xff]
        %v714 = vld [vmem:[%s381 + $0x230] sm:$0xff]
        %v715 = vld [vmem:[%s381 + $0x238] sm:$0xff]
        %v716 = vld [vmem:[%s381 + $0x240] sm:$0xff]
        %v717 = vld [vmem:[%s381 + $0x248] sm:$0xff]
        %v718 = vld [vmem:[%s381 + $0x250] sm:$0xff]
        %v719 = vld [vmem:[%s381 + $0x258] sm:$0xff]
        %v720 = vld [vmem:[%s381 + $0x260] sm:$0xff]
        %v721 = vld [vmem:[%s381 + $0x268] sm:$0xff]
        %v722 = vld [vmem:[%s381 + $0x270] sm:$0xff]
        %v723 = vld [vmem:[%s381 + $0x278] sm:$0xff]
        %v724 = vld [vmem:[%s381 + $0x280] sm:$0xff]
        %v725 = vld [vmem:[%s381 + $0x288] sm:$0xff]
        %v726 = vld [vmem:[%s381 + $0x290] sm:$0xff]
        %v727 = vld [vmem:[%s381 + $0x298] sm:$0xff]
        %v728 = vld [vmem:[%s381 + $0x2a0] sm:$0xff]
        %v729 = vld [vmem:[%s381 + $0x2a8] sm:$0xff]
        %v730 = vld [vmem:[%s381 + $0x2b0] sm:$0xff]
        %v731 = vld [vmem:[%s381 + $0x2b8] sm:$0xff]
        %v732 = vld [vmem:[%s381 + $0x2c0] sm:$0xff]
        %v733 = vld [vmem:[%s381 + $0x2c8] sm:$0xff]
        %v734 = vld [vmem:[%s381 + $0x2d0] sm:$0xff]
        %v735 = vld [vmem:[%s381 + $0x2d8] sm:$0xff]
        %v736 = vld [vmem:[%s381 + $0x2e0] sm:$0xff]
        %v737 = vld [vmem:[%s381 + $0x2e8] sm:$0xff]
        %v738 = vld [vmem:[%s381 + $0x2f0] sm:$0xff]
        %v739 = vld [vmem:[%s381 + $0x2f8] sm:$0xff]
        %v740 = vld [vmem:[%s381 + $0x300] sm:$0xff]
        %v741 = vld [vmem:[%s381 + $0x308] sm:$0xff]
        %v742 = vld [vmem:[%s381 + $0x310] sm:$0xff]
        %v743 = vld [vmem:[%s381 + $0x318] sm:$0xff]
        %v744 = vld [vmem:[%s381 + $0x320] sm:$0xff]
        %v745 = vld [vmem:[%s381 + $0x328] sm:$0xff]
        %v746 = vld [vmem:[%s381 + $0x330] sm:$0xff]
        %v747 = vld [vmem:[%s381 + $0x338] sm:$0xff]
        %v748 = vld [vmem:[%s381 + $0x340] sm:$0xff]
        %v749 = vld [vmem:[%s381 + $0x348] sm:$0xff]
        %v750 = vld [vmem:[%s381 + $0x350] sm:$0xff]
        %v751 = vld [vmem:[%s381 + $0x358] sm:$0xff]
        %v752 = vld [vmem:[%s381 + $0x360] sm:$0xff]
        %v753 = vld [vmem:[%s381 + $0x368] sm:$0xff]
        %v754 = vld [vmem:[%s381 + $0x370] sm:$0xff]
        %v755 = vld [vmem:[%s381 + $0x378] sm:$0xff]
        %v756 = vld [vmem:[%s381 + $0x380] sm:$0xff]
        %v757 = vld [vmem:[%s381 + $0x388] sm:$0xff]
        %v758 = vld [vmem:[%s381 + $0x390] sm:$0xff]
        %v759 = vld [vmem:[%s381 + $0x398] sm:$0xff]
        %v760 = vld [vmem:[%s381 + $0x3a0] sm:$0xff]
        %v761 = vld [vmem:[%s381 + $0x3a8] sm:$0xff]
        %v762 = vld [vmem:[%s381 + $0x3b0] sm:$0xff]
        %v763 = vld [vmem:[%s381 + $0x3b8] sm:$0xff]
        %v764 = vld [vmem:[%s381 + $0x3c0] sm:$0xff]
        %v765 = vld [vmem:[%s381 + $0x3c8] sm:$0xff]
        %v766 = vld [vmem:[%s381 + $0x3d0] sm:$0xff]
        %v767 = vld [vmem:[%s381 + $0x3d8] sm:$0xff]
        %v768 = vld [vmem:[%s381 + $0x3e0] sm:$0xff]
        %v769 = vld [vmem:[%s381 + $0x3e8] sm:$0xff]
        %v770 = vld [vmem:[%s381 + $0x3f0] sm:$0xff]
        %v771 = vld [vmem:[%s381 + $0x3f8] sm:$0xff]
        %v772 = vld [vmem:[%s381 + $0x400] sm:$0xff]
        %v773 = vld [vmem:[%s381 + $0x408] sm:$0xff]
        %v774 = vld [vmem:[%s381 + $0x410] sm:$0xff]
        %v775 = vld [vmem:[%s381 + $0x418] sm:$0xff]
        %v776 = vld [vmem:[%s381 + $0x420] sm:$0xff]
        %v777 = vld [vmem:[%s381 + $0x428] sm:$0xff]
        %v778 = vld [vmem:[%s381 + $0x430] sm:$0xff]
        %v779 = vld [vmem:[%s381 + $0x438] sm:$0xff]
        %v780 = vld [vmem:[%s381 + $0x440] sm:$0xff]
        %v781 = vld [vmem:[%s381 + $0x448] sm:$0xff]
        %v782 = vld [vmem:[%s381 + $0x450] sm:$0xff]
        %v783 = vld [vmem:[%s381 + $0x458] sm:$0xff]
        %v784 = vld [vmem:[%s381 + $0x460] sm:$0xff]
        %v785 = vld [vmem:[%s381 + $0x468] sm:$0xff]
        %v786 = vld [vmem:[%s381 + $0x470] sm:$0xff]
        %v787 = vld [vmem:[%s381 + $0x478] sm:$0xff]
        %v788 = vld [vmem:[%s381 + $0x480] sm:$0xff]
        %v789 = vld [vmem:[%s381 + $0x488] sm:$0xff]
        %v790 = vld [vmem:[%s381 + $0x490] sm:$0xff]
        %v791 = vld [vmem:[%s381 + $0x498] sm:$0xff]
        %v792 = vld [vmem:[%s381 + $0x4a0] sm:$0xff]
        %v793 = vld [vmem:[%s381 + $0x4a8] sm:$0xff]
        %v794 = vld [vmem:[%s381 + $0x4b0] sm:$0xff]
        %v795 = vld [vmem:[%s381 + $0x4b8] sm:$0xff]
        %v796 = vld [vmem:[%s381 + $0x4c0] sm:$0xff]
        %v797 = vld [vmem:[%s381 + $0x4c8] sm:$0xff]
        %v798 = vld [vmem:[%s381 + $0x4d0] sm:$0xff]
        %v799 = vld [vmem:[%s381 + $0x4d8] sm:$0xff]
        %v800 = vld [vmem:[%s381 + $0x4e0] sm:$0xff]
        %v801 = vld [vmem:[%s381 + $0x4e8] sm:$0xff]
        %v802 = vld [vmem:[%s381 + $0x4f0] sm:$0xff]
        %v803 = vld [vmem:[%s381 + $0x4f8] sm:$0xff]
        %v804 = vld [vmem:[%s381 + $0x500] sm:$0xff]
        %v805 = vld [vmem:[%s381 + $0x508] sm:$0xff]
        %v806 = vld [vmem:[%s381 + $0x510] sm:$0xff]
        %v807 = vld [vmem:[%s381 + $0x518] sm:$0xff]
        %v808 = vld [vmem:[%s381 + $0x520] sm:$0xff]
        %v809 = vld [vmem:[%s381 + $0x528] sm:$0xff]
        %v810 = vld [vmem:[%s381 + $0x530] sm:$0xff]
        %v811 = vld [vmem:[%s381 + $0x538] sm:$0xff]
        %v812 = vld [vmem:[%s381 + $0x540] sm:$0xff]
        %v813 = vld [vmem:[%s381 + $0x548] sm:$0xff]
        %v814 = vld [vmem:[%s381 + $0x550] sm:$0xff]
        %v815 = vld [vmem:[%s381 + $0x558] sm:$0xff]
        %v816 = vld [vmem:[%s381 + $0x560] sm:$0xff]
        %v817 = vld [vmem:[%s381 + $0x568] sm:$0xff]
        %v818 = vld [vmem:[%s381 + $0x570] sm:$0xff]
        %v819 = vld [vmem:[%s381 + $0x578] sm:$0xff]
        %v820 = vld [vmem:[%s381 + $0x580] sm:$0xff]
        %v821 = vld [vmem:[%s381 + $0x588] sm:$0xff]
        %v822 = vld [vmem:[%s381 + $0x590] sm:$0xff]
        %v823 = vld [vmem:[%s381 + $0x598] sm:$0xff]
        %v824 = vld [vmem:[%s381 + $0x5a0] sm:$0xff]
        %v825 = vld [vmem:[%s381 + $0x5a8] sm:$0xff]
        %v826 = vld [vmem:[%s381 + $0x5b0] sm:$0xff]
        %v827 = vld [vmem:[%s381 + $0x5b8] sm:$0xff]
        %v828 = vld [vmem:[%s381 + $0x5c0] sm:$0xff]
        %v829 = vld [vmem:[%s381 + $0x5c8] sm:$0xff]
        %v830 = vld [vmem:[%s381 + $0x5d0] sm:$0xff]
        %v831 = vld [vmem:[%s381 + $0x5d8] sm:$0xff]
        %v832 = vld [vmem:[%s381 + $0x5e0] sm:$0xff]
        %v833 = vld [vmem:[%s381 + $0x5e8] sm:$0xff]
        %v834 = vld [vmem:[%s381 + $0x5f0] sm:$0xff]
        %v835 = vld [vmem:[%s381 + $0x5f8] sm:$0xff]
        %v836 = vld [vmem:[%s390] sm:$0x7]
        %v838 = vlaneseq
        %v839 = vshrl.u32 %v838, 7
        %v840 = vsub.s32 0, %v839
        %v841 = vrot.slane %v836, %v840
        %v842 = vlaneseq
        %v843 = vshrl.u32 %v842, 7
        %v844 = vsub.s32 1, %v843
        %v845 = vrot.slane %v836, %v844
        %v846 = vlaneseq
        %v847 = vshrl.u32 %v846, 7
        %v848 = vsub.s32 2, %v847
        %v849 = vrot.slane %v836, %v848
        %853 = vmatprep.subr.mxu0 %v690
        %854 = vmatpush1.msra.mxu0 %v689
        %855 = vmatprep.subr.mxu0 %v687
        %856 = vmatpush1.msra.mxu0 %v686
        %857 = vmatprep.subr.mxu0 %v684
        %858 = vmatpush1.msra.mxu0 %v683
        %859 = vmatprep.subr.mxu0 %v681
        %860 = vmatpush1.msra.mxu0 %v680
        %861 = vmatprep.subr.mxu0 %v678
        %862 = vmatpush1.msra.mxu0 %v677
        %863 = vmatprep.subr.mxu0 %v675
        %864 = vmatpush1.msra.mxu0 %v674
        %865 = vmatprep.subr.mxu0 %v672
        %866 = vmatpush1.msra.mxu0 %v671
        %867 = vmatprep.subr.mxu0 %v669
        %868 = vmatpush1.msra.mxu0 %v668
        %869 = vmatprep.subr.mxu0 %v666
        %870 = vmatpush1.msra.mxu0 %v665
        %871 = vmatprep.subr.mxu0 %v663
        %872 = vmatpush1.msra.mxu0 %v662
        %873 = vmatprep.subr.mxu0 %v660
        %874 = vmatpush1.msra.mxu0 %v659
        %875 = vmatprep.subr.mxu0 %v657
        %876 = vmatpush1.msra.mxu0 %v656
        %877 = vmatprep.subr.mxu0 %v654
        %878 = vmatpush1.msra.mxu0 %v653
        %879 = vmatprep.subr.mxu0 %v651
        %880 = vmatpush1.msra.mxu0 %v650
        %881 = vmatprep.subr.mxu0 %v648
        %882 = vmatpush1.msra.mxu0 %v647
        %883 = vmatprep.subr.mxu0 %v645
        %884 = vmatpush1.msra.mxu0 %v644
        %885 = vmatprep.subr.mxu0 %v738
        %886 = vmatpush2.msra.mxu0 %v737
        %887 = vmatprep.subr.mxu0 %v735
        %888 = vmatpush2.msra.mxu0 %v734
        %889 = vmatprep.subr.mxu0 %v732
        %890 = vmatpush2.msra.mxu0 %v731
        %891 = vmatprep.subr.mxu0 %v729
        %892 = vmatpush2.msra.mxu0 %v728
        %893 = vmatprep.subr.mxu0 %v726
        %894 = vmatpush2.msra.mxu0 %v725
        %895 = vmatprep.subr.mxu0 %v723
        %896 = vmatpush2.msra.mxu0 %v722
        %897 = vmatprep.subr.mxu0 %v720
        %898 = vmatpush2.msra.mxu0 %v719
        %899 = vmatprep.subr.mxu0 %v717
        %900 = vmatpush2.msra.mxu0 %v716
        %901 = vmatprep.subr.mxu0 %v714
        %902 = vmatpush2.msra.mxu0 %v713
        %903 = vmatprep.subr.mxu0 %v711
        %904 = vmatpush2.msra.mxu0 %v710
        %905 = vmatprep.subr.mxu0 %v708
        %906 = vmatpush2.msra.mxu0 %v707
        %907 = vmatprep.subr.mxu0 %v705
        %908 = vmatpush2.msra.mxu0 %v704
        %909 = vmatprep.subr.mxu0 %v702
        %910 = vmatpush2.msra.mxu0 %v701
        %911 = vmatprep.subr.mxu0 %v699
        %912 = vmatpush2.msra.mxu0 %v698
        %913 = vmatprep.subr.mxu0 %v696
        %914 = vmatpush2.msra.mxu0 %v695
        %915 = vmatprep.subr.mxu0 %v693
        %916 = vmatpush2.msra.mxu0 %v692
        %917 = vmatprep.mubr.f32.mxu0 %v641
        %918 = vmatmul.mubr.f32.gmra.mxu0 %v640
        %v919 = vpop.f32.mrf.mxu0
        %v920 = vadd.f32 %v841, %v919
        %v921 = vpop.f32.mrf.mxu0
        %v922 = vadd.f32 %v845, %v921
        %923 = vdwg.mxu0
        %924 = vmatprep.subr.mxu0 %v786
        %925 = vmatpush1.msra.mxu0 %v785
        %926 = vmatprep.subr.mxu0 %v783
        %927 = vmatpush1.msra.mxu0 %v782
        %928 = vmatprep.subr.mxu0 %v780
        %929 = vmatpush1.msra.mxu0 %v779
        %930 = vmatprep.subr.mxu0 %v777
        %931 = vmatpush1.msra.mxu0 %v776
        %932 = vmatprep.subr.mxu0 %v774
        %933 = vmatpush1.msra.mxu0 %v773
        %934 = vmatprep.subr.mxu0 %v771
        %935 = vmatpush1.msra.mxu0 %v770
        %936 = vmatprep.subr.mxu0 %v768
        %937 = vmatpush1.msra.mxu0 %v767
        %938 = vmatprep.subr.mxu0 %v765
        %939 = vmatpush1.msra.mxu0 %v764
        %940 = vmatprep.subr.mxu0 %v762
        %941 = vmatpush1.msra.mxu0 %v761
        %942 = vmatprep.subr.mxu0 %v759
        %943 = vmatpush1.msra.mxu0 %v758
        %944 = vmatprep.subr.mxu0 %v756
        %945 = vmatpush1.msra.mxu0 %v755
        %946 = vmatprep.subr.mxu0 %v753
        %947 = vmatpush1.msra.mxu0 %v752
        %948 = vmatprep.subr.mxu0 %v750
        %949 = vmatpush1.msra.mxu0 %v749
        %950 = vmatprep.subr.mxu0 %v747
        %951 = vmatpush1.msra.mxu0 %v746
        %952 = vmatprep.subr.mxu0 %v744
        %953 = vmatpush1.msra.mxu0 %v743
        %954 = vmatprep.subr.mxu0 %v741
        %955 = vmatpush1.msra.mxu0 %v740
        %956 = vmatprep.subr.mxu0 %v834
        %957 = vmatpush2.msra.mxu0 %v833
        %958 = vmatprep.subr.mxu0 %v831
        %959 = vmatpush2.msra.mxu0 %v830
        %960 = vmatprep.subr.mxu0 %v828
        %961 = vmatpush2.msra.mxu0 %v827
        %962 = vmatprep.subr.mxu0 %v825
        %963 = vmatpush2.msra.mxu0 %v824
        %964 = vmatprep.subr.mxu0 %v822
        %965 = vmatpush2.msra.mxu0 %v821
        %966 = vmatprep.subr.mxu0 %v819
        %967 = vmatpush2.msra.mxu0 %v818
        %968 = vmatprep.subr.mxu0 %v816
        %969 = vmatpush2.msra.mxu0 %v815
        %970 = vmatprep.subr.mxu0 %v813
        %971 = vmatpush2.msra.mxu0 %v812
        %972 = vmatprep.subr.mxu0 %v810
        %973 = vmatpush2.msra.mxu0 %v809
        %974 = vmatprep.subr.mxu0 %v807
        %975 = vmatpush2.msra.mxu0 %v806
        %976 = vmatprep.subr.mxu0 %v804
        %977 = vmatpush2.msra.mxu0 %v803
        %978 = vmatprep.subr.mxu0 %v801
        %979 = vmatpush2.msra.mxu0 %v800
        %980 = vmatprep.subr.mxu0 %v798
        %981 = vmatpush2.msra.mxu0 %v797
        %982 = vmatprep.subr.mxu0 %v795
        %983 = vmatpush2.msra.mxu0 %v794
        %984 = vmatprep.subr.mxu0 %v792
        %985 = vmatpush2.msra.mxu0 %v791
        %986 = vmatprep.subr.mxu0 %v789
        %987 = vmatpush2.msra.mxu0 %v788
        %988 = vmatprep.mubr.f32.mxu0 %v643
        %989 = vmatmul.mubr.f32.gmra.mxu0 %v642
        %v990 = vpop.f32.mrf.mxu0
        %v991 = vadd.f32 %v920, %v990
        %v992 = vpop.f32.mrf.mxu0
        %v993 = vadd.f32 %v922, %v992
        %994 = vdwg.mxu0
        %995 = vmatprep.subr.mxu0 0.0
        %996 = vmatpush1.msra.mxu0 %v691
        %997 = vmatprep.subr.mxu0 0.0
        %998 = vmatpush1.msra.mxu0 %v688
        %999 = vmatprep.subr.mxu0 0.0
        %1000 = vmatpush1.msra.mxu0 %v685
        %1001 = vmatprep.subr.mxu0 0.0
        %1002 = vmatpush1.msra.mxu0 %v682
        %1003 = vmatprep.subr.mxu0 0.0
        %1004 = vmatpush1.msra.mxu0 %v679
        %1005 = vmatprep.subr.mxu0 0.0
        %1006 = vmatpush1.msra.mxu0 %v676
        %1007 = vmatprep.subr.mxu0 0.0
        %1008 = vmatpush1.msra.mxu0 %v673
        %1009 = vmatprep.subr.mxu0 0.0
        %1010 = vmatpush1.msra.mxu0 %v670
        %1011 = vmatprep.subr.mxu0 0.0
        %1012 = vmatpush1.msra.mxu0 %v667
        %1013 = vmatprep.subr.mxu0 0.0
        %1014 = vmatpush1.msra.mxu0 %v664
        %1015 = vmatprep.subr.mxu0 0.0
        %1016 = vmatpush1.msra.mxu0 %v661
        %1017 = vmatprep.subr.mxu0 0.0
        %1018 = vmatpush1.msra.mxu0 %v658
        %1019 = vmatprep.subr.mxu0 0.0
        %1020 = vmatpush1.msra.mxu0 %v655
        %1021 = vmatprep.subr.mxu0 0.0
        %1022 = vmatpush1.msra.mxu0 %v652
        %1023 = vmatprep.subr.mxu0 0.0
        %1024 = vmatpush1.msra.mxu0 %v649
        %1025 = vmatprep.subr.mxu0 0.0
        %1026 = vmatpush1.msra.mxu0 %v646
        %1027 = vmatprep.subr.mxu0 0.0
        %1028 = vmatpush2.msra.mxu0 %v739
        %1029 = vmatprep.subr.mxu0 0.0
        %1030 = vmatpush2.msra.mxu0 %v736
        %1031 = vmatprep.subr.mxu0 0.0
        %1032 = vmatpush2.msra.mxu0 %v733
        %1033 = vmatprep.subr.mxu0 0.0
        %1034 = vmatpush2.msra.mxu0 %v730
        %1035 = vmatprep.subr.mxu0 0.0
        %1036 = vmatpush2.msra.mxu0 %v727
        %1037 = vmatprep.subr.mxu0 0.0
        %1038 = vmatpush2.msra.mxu0 %v724
        %1039 = vmatprep.subr.mxu0 0.0
        %1040 = vmatpush2.msra.mxu0 %v721
        %1041 = vmatprep.subr.mxu0 0.0
        %1042 = vmatpush2.msra.mxu0 %v718
        %1043 = vmatprep.subr.mxu0 0.0
        %1044 = vmatpush2.msra.mxu0 %v715
        %1045 = vmatprep.subr.mxu0 0.0
        %1046 = vmatpush2.msra.mxu0 %v712
        %1047 = vmatprep.subr.mxu0 0.0
        %1048 = vmatpush2.msra.mxu0 %v709
        %1049 = vmatprep.subr.mxu0 0.0
        %1050 = vmatpush2.msra.mxu0 %v706
        %1051 = vmatprep.subr.mxu0 0.0
        %1052 = vmatpush2.msra.mxu0 %v703
        %1053 = vmatprep.subr.mxu0 0.0
        %1054 = vmatpush2.msra.mxu0 %v700
        %1055 = vmatprep.subr.mxu0 0.0
        %1056 = vmatpush2.msra.mxu0 %v697
        %1057 = vmatprep.subr.mxu0 0.0
        %1058 = vmatpush2.msra.mxu0 %v694
        %1059 = vmatprep.mubr.f32.mxu0 %v641
        %1060 = vmatmul.mubr.f32.gmra.mxu0 %v640
        %v1061 = vpop.f32.mrf.mxu0
        %v1062 = vadd.f32 %v849, %v1061
        %v1063 = vpop.f32.mrf.mxu0
        %1064 = vdwg.mxu0
        %1065 = vmatprep.subr.mxu0 0.0
        %1066 = vmatpush1.msra.mxu0 %v787
        %1067 = vmatprep.subr.mxu0 0.0
        %1068 = vmatpush1.msra.mxu0 %v784
        %1069 = vmatprep.subr.mxu0 0.0
        %1070 = vmatpush1.msra.mxu0 %v781
        %1071 = vmatprep.subr.mxu0 0.0
        %1072 = vmatpush1.msra.mxu0 %v778
        %1073 = vmatprep.subr.mxu0 0.0
        %1074 = vmatpush1.msra.mxu0 %v775
        %1075 = vmatprep.subr.mxu0 0.0
        %1076 = vmatpush1.msra.mxu0 %v772
        %1077 = vmatprep.subr.mxu0 0.0
        %1078 = vmatpush1.msra.mxu0 %v769
        %1079 = vmatprep.subr.mxu0 0.0
        %1080 = vmatpush1.msra.mxu0 %v766
        %1081 = vmatprep.subr.mxu0 0.0
        %1082 = vmatpush1.msra.mxu0 %v763
        %1083 = vmatprep.subr.mxu0 0.0
        %1084 = vmatpush1.msra.mxu0 %v760
        %1085 = vmatprep.subr.mxu0 0.0
        %1086 = vmatpush1.msra.mxu0 %v757
        %1087 = vmatprep.subr.mxu0 0.0
        %1088 = vmatpush1.msra.mxu0 %v754
        %1089 = vmatprep.subr.mxu0 0.0
        %1090 = vmatpush1.msra.mxu0 %v751
        %1091 = vmatprep.subr.mxu0 0.0
        %1092 = vmatpush1.msra.mxu0 %v748
        %1093 = vmatprep.subr.mxu0 0.0
        %1094 = vmatpush1.msra.mxu0 %v745
        %1095 = vmatprep.subr.mxu0 0.0
        %1096 = vmatpush1.msra.mxu0 %v742
        %1097 = vmatprep.subr.mxu0 0.0
        %1098 = vmatpush2.msra.mxu0 %v835
        %1099 = vmatprep.subr.mxu0 0.0
        %1100 = vmatpush2.msra.mxu0 %v832
        %1101 = vmatprep.subr.mxu0 0.0
        %1102 = vmatpush2.msra.mxu0 %v829
        %1103 = vmatprep.subr.mxu0 0.0
        %1104 = vmatpush2.msra.mxu0 %v826
        %1105 = vmatprep.subr.mxu0 0.0
        %1106 = vmatpush2.msra.mxu0 %v823
        %1107 = vmatprep.subr.mxu0 0.0
        %1108 = vmatpush2.msra.mxu0 %v820
        %1109 = vmatprep.subr.mxu0 0.0
        %1110 = vmatpush2.msra.mxu0 %v817
        %1111 = vmatprep.subr.mxu0 0.0
        %1112 = vmatpush2.msra.mxu0 %v814
        %1113 = vmatprep.subr.mxu0 0.0
        %1114 = vmatpush2.msra.mxu0 %v811
        %1115 = vmatprep.subr.mxu0 0.0
        %1116 = vmatpush2.msra.mxu0 %v808
        %1117 = vmatprep.subr.mxu0 0.0
        %1118 = vmatpush2.msra.mxu0 %v805
        %1119 = vmatprep.subr.mxu0 0.0
        %1120 = vmatpush2.msra.mxu0 %v802
        %1121 = vmatprep.subr.mxu0 0.0
        %1122 = vmatpush2.msra.mxu0 %v799
        %1123 = vmatprep.subr.mxu0 0.0
        %1124 = vmatpush2.msra.mxu0 %v796
        %1125 = vmatprep.subr.mxu0 0.0
        %1126 = vmatpush2.msra.mxu0 %v793
        %1127 = vmatprep.subr.mxu0 0.0
        %1128 = vmatpush2.msra.mxu0 %v790
        %1129 = vmatprep.mubr.f32.mxu0 %v643
        %1130 = vmatmul.mubr.f32.gmra.mxu0 %v642
        %v1131 = vpop.f32.mrf.mxu0
        %v1132 = vadd.f32 %v1062, %v1131
        %v1133 = vpop.f32.mrf.mxu0
        %1134 = vdwg.mxu0
        %v1135 = vtanh.pop %v991
        %v1136 = vtanh.pop %v993
        %v1137 = vtanh.pop %v1132
        %v1138 = vld [vmem:[%s399] sm:$0x7]
        %v1140 = vlaneseq
        %v1141 = vshrl.u32 %v1140, 7
        %v1142 = vsub.s32 0, %v1141
        %v1143 = vrot.slane %v1138, %v1142
        %v1144 = vlaneseq
        %v1145 = vshrl.u32 %v1144, 7
        %v1146 = vsub.s32 1, %v1145
        %v1147 = vrot.slane %v1138, %v1146
        %v1148 = vlaneseq
        %v1149 = vshrl.u32 %v1148, 7
        %v1150 = vsub.s32 2, %v1149
        %v1151 = vrot.slane %v1138, %v1150
        %v1155 = vmul.f32 %v1135, %v1143
        %v1156 = vmul.f32 %v1136, %v1147
        %v1157 = vmul.f32 %v1137, %v1151
        %v1158 = vadd.f32 %v1155, %v1156
        %v1159 = vadd.f32 %v1158, %v1157
        %1160 = vadd.xlane.f32.xlu0 %v1159
        %v1161 = vpop.xlane.xlu0 %1160
        %v1162 = vld [vmem:[%s454] sm:$0x1]
        %v1164 = vlaneseq
        %v1165 = vshrl.u32 %v1164, 7
        %v1166 = vsub.s32 0, %v1165
        %v1167 = vrot.slane %v1162, %v1166
        %v1169 = vadd.f32 %v1161, %v1167
        %vm1170 = vcmask 7168
        %1171 = vst.msk [vmem:[%s458] sm:$0xff] %vm1170, %v1169
        %p1172 = scmp.lt.s32.totalorder %s27, 1
        %s1173 = scalar_select %p1172, %s27, 1
        %s1174 = smul.addr %s1173, 8
        %s1175 = scalar_lea.vmem %s7, %s1174
        // Predicated region
        $region69: #{sac_critic_forward.1} parent=47 // pred_check
          %p1176 = pneg %p222
        $region70: #{sac_critic_forward.1} parent=47 // pred_check_branch
          %1178 = sbr.rel (%p1176) target = $region72
        $region71: #{sac_critic_forward.1} parent=47 // pred_region
          _
        $region72: #{sac_critic_forward.1} parent=47 // pred_fallthru
          _
      $region48: #{sac_critic_forward.1} parent=5 // pred_fallthru
        _
      %p1179 = scmp.le.s32.totalorder 2, %s22
      // Predicated region
      $region73: #{sac_critic_forward.1} parent=5 // pred_check
        %p1180 = pneg %p1179
      $region74: #{sac_critic_forward.1} parent=5 // pred_check_branch
        %1182 = sbr.rel (%p1180) target = $region76
      $region75: #{sac_critic_forward.1} parent=5 // pred_region
        %s1183 = ssub.s32 %s22, 2
        // Predicated region
        $region77: #{sac_critic_forward.1} parent=75 // pred_check
          %p1184 = pneg %p228
        $region78: #{sac_critic_forward.1} parent=75 // pred_check_branch
          %1186 = sbr.rel (%p1184) target = $region80
        $region79: #{sac_critic_forward.1} parent=75 // pred_region
          %p1187 = scmp.lt.s32.totalorder %s28, 1
          %s1188 = scalar_select %p1187, %s28, 1
          %s1189 = smul.addr %s1188, 8
          %s1190 = scalar_lea.vmem %s7, %s1189
        $region80: #{sac_critic_forward.1} parent=75 // pred_fallthru
          _
      $region76: #{sac_critic_forward.1} parent=5 // pred_fallthru
        _
    $region6: #{sac_critic_forward.1} parent=1 // loop_footer
      %s26 = sadd.s32 1, %s22
    $region7: #{sac_critic_forward.1} parent=1 // loop_footer_branch
      %21 = sbr.rel target = $region3
    $region8: #{sac_critic_forward.1} parent=1 // loop_exit
      _
    %1191 = vsyncpa [#allocation3], 1
    %s1192 = scalar_lea.sflag [#allocation3], 1
    %1193 = vsyncpa %s1192, 1
    %1194 = vsyncpa [#allocation5], 1
    %s1195 = scalar_lea.sflag [#allocation5], 1
    %1196 = vsyncpa %s1195, 1
    %1197 = vsyncpa [#allocation8], 1
    %s1198 = scalar_lea.sflag [#allocation8], 1
    %1199 = vsyncpa %s1198, 1

</llo_original>
